<compile_context>
chip_gen: v7x
topology: tpu7x:2x2x1
jax: 0.10.0
libtpu: 0.0.40
codegen_flags: <defaults>
</compile_context>

<pallas_src>
from dataclasses import dataclass
from enum import Enum

import numpy as np
import jax
import jax.numpy as jnp
from jax.experimental import pallas as pl
from jax.experimental.pallas import tpu as pltpu


class NoiseOptions(Enum):
    NONE = 0
    BERNOULLI = 1
    GAUSSIAN = 2


@dataclass
class Config:
    n_instances: int
    n_features: int
    n_hidden: int
    tied_weights: bool
    weight_distri: str
    nonlinearity: bool
    noise: NoiseOptions
    noise_stdev: float


# ----------------------------- Pallas kernels ------------------------------ #

def _make_kernel(tied: bool, has_noise: bool, nonlinearity: bool):
    """Build the kernel body for the (tied, has_noise) variant.

    Refs (in order):
      x_ref:     (G, B, F)   features for G instances
      w refs:    (G, F, H)   tied -> one weight ref (DMA'd once per step);
                             untied -> encoder ref then decoder ref
      nproj_ref: (G, 1, F)   precomputed noise @ W_dec^T (only if has_noise)
      o_ref:     (G, B, F)   reconstruction (f32)
    """

    def kernel(*refs):
        if tied:
            if has_noise:
                x_ref, w_ref, nproj_ref, o_ref = refs
            else:
                x_ref, w_ref, o_ref = refs
            w_enc = w_dec = w_ref[...]
        else:
            if has_noise:
                x_ref, we_ref, wd_ref, nproj_ref, o_ref = refs
            else:
                x_ref, we_ref, wd_ref, o_ref = refs
            w_enc = we_ref[...]
            w_dec = wd_ref[...]

        cdt = w_enc.dtype                      # compute dtype (f32 or bf16)
        x = x_ref[...].astype(cdt)

        # encode: (G,B,F) x (G,F,H) -> (G,B,H); f32 accumulation on the MXU.
        hidden = jnp.einsum("gbf,gfh->gbh", x, w_enc,
                            preferred_element_type=jnp.float32)
        # decode: contract over H in stored layout -- no w.T materialized.
        out = jnp.einsum("gbh,gfh->gbf", hidden.astype(cdt), w_dec,
                         preferred_element_type=jnp.float32)
        if has_noise:
            # Noise commutes with the linear decoder (ReLU is applied after),
            # so its projection was precomputed once in the wrapper.  f32 add.
            out = out + nproj_ref[...]
        if nonlinearity:
            out = jnp.maximum(out, 0.0)        # f32 epilogue (v5e VPU has no bf16)
        o_ref[...] = out.astype(o_ref.dtype)

    return kernel


# --------------------------- Tile-size selection ---------------------------- #

_DEFAULT_VMEM_CAPACITY = 64 << 20   # conservative fallback (v7x per-TC VMEM)


def _round_up(x: int, m: int) -> int:
    return ((x + m - 1) // m) * m


def _vmem_capacity_bytes() -> int:
    try:
        info = pltpu.get_tpu_info()
        cap = int(getattr(info, "vmem_capacity_bytes", _DEFAULT_VMEM_CAPACITY))
        if cap > 0:
            return cap
    except Exception:
        pass
    return _DEFAULT_VMEM_CAPACITY


def _num_tensorcores() -> int:
    try:
        return max(1, int(getattr(jax.devices()[0], "num_cores", 1)))
    except Exception:
        return 1


def _per_instance_vmem_bytes(B, F, H, n_weight_arrays, weight_itemsize, has_noise):
    """Padding-aware f32/bf16 VMEM footprint of one instance's tiles.

    VMEM tiles are (sublane, lane)-padded: lanes to 128, sublanes to 8 for
    f32 and 16 for bf16 (packed sublanes).
    """
    sub_w = 32 // weight_itemsize               # sublane granularity of weights
    B_s = _round_up(B, 8)
    F_s = _round_up(F, sub_w)
    F_l = _round_up(F, 128)
    H_l = _round_up(H, 128)

    w_bytes = n_weight_arrays * F_s * H_l * weight_itemsize   # (F,H) weight tile(s)
    xo_bytes = 2 * B_s * F_l * 4                              # x tile + out tile (f32)
    nproj_bytes = (8 * F_l * 4) if has_noise else 0           # (1,F) -> (8,128k) f32
    pipelined = w_bytes + xo_bytes + nproj_bytes              # double-buffered by Pallas
    scratch = B_s * H_l * 4                                   # hidden intermediate (f32)
    return pipelined, scratch


def _pick_instances_per_block(n_instances, pipelined_per_inst, scratch_per_inst,
                              tile_budget_bytes, prefer_multi_step):
    """Largest divisor of n_instances whose (double-buffered) footprint fits
    the budget.  Only prefers >=2 grid steps when the chip has >=2 TensorCores
    (so the 'parallel' instance axis can actually be sharded)."""
    divisors = [g for g in range(1, n_instances + 1) if n_instances % g == 0]

    def fits(g):
        return g * (2 * pipelined_per_inst + scratch_per_inst) <= tile_budget_bytes

    fitting = [g for g in divisors if fits(g)]
    if not fitting:
        return 1
    if prefer_multi_step:
        multi = [g for g in fitting if n_instances // g >= 2]
        if multi:
            return max(multi)
    return max(fitting)


# ------------------------------- Wrapper ------------------------------------ #

def autoencoder_forward(features, w_enc, w_dec=None, noise=None, *,
                        nonlinearity: bool = True,
                        compute_dtype=jnp.float32,
                        instances_per_block: int | None = None):
    """features: (I, B, F); w_enc (and optional w_dec): (I, F, H); noise: (H,)
    or None.  w_dec=None means tied weights (w_enc used for both).
    compute_dtype=bf16 stores weights in HBM as bf16 and runs the MXU at its
    native bf16 rate with f32 accumulation (halves weight DMA bytes)."""
    I, B, F = features.shape
    H = w_enc.shape[-1]
    tied = w_dec is None
    has_noise = noise is not None

    compute_dtype = jnp.dtype(compute_dtype)
    weight_itemsize = compute_dtype.itemsize

    # Weights live in HBM at the compute dtype (dominant per-step DMA).
    w_enc_c = w_enc.astype(compute_dtype)
    w_dec_c = None if tied else w_dec.astype(compute_dtype)

    args = [features, w_enc_c] + ([] if tied else [w_dec_c])
    if has_noise:
        # Hoist the noise through the linear decoder (computed once, in f32):
        # noise_proj[i, f] = sum_h noise[h] * W_dec[i, f, h].
        w_for_noise = w_enc if tied else w_dec
        noise_proj = jnp.einsum(
            "h,ifh->if",
            jnp.asarray(noise, dtype=jnp.float32),
            w_for_noise.astype(jnp.float32))[:, None, :]          # (I, 1, F)
        args.append(noise_proj)

    # ---- padding- & generation-aware tile sizing ----
    n_weight_arrays = 1 if tied else 2
    pipelined_pi, scratch_pi = _per_instance_vmem_bytes(
        B, F, H, n_weight_arrays, weight_itemsize, has_noise)

    capacity = _vmem_capacity_bytes()
    tile_budget = (capacity * 3) // 8           # ~24 MiB on v7x, ~48 MiB on v5e/v6e
    vmem_limit = max(32 << 20, tile_budget + (8 << 20))
    vmem_limit = min(vmem_limit, max(capacity - (8 << 20), 16 << 20))

    if instances_per_block is None:
        instances_per_block = _pick_instances_per_block(
            I, pipelined_pi, scratch_pi, tile_budget,
            prefer_multi_step=_num_tensorcores() >= 2)
    G = instances_per_block
    assert I % G == 0, "instances_per_block must divide n_instances"
    grid = (I // G,)

    feat_spec = pl.BlockSpec((G, B, F), lambda i: (i, 0, 0))
    w_spec = pl.BlockSpec((G, F, H), lambda i: (i, 0, 0))
    nproj_spec = pl.BlockSpec((G, 1, F), lambda i: (i, 0, 0))
    # TODO(synk): for production shapes with F,H << 128 a lane-dense I/O layout
    # (wrapper-side flatten so the output minor dim is a multiple of 128) would
    # avoid masked vst.msk partial stores; kept the natural (I,B,F) layout here
    # since it requires an in-kernel relayout.
    out_spec = pl.BlockSpec((G, B, F), lambda i: (i, 0, 0))

    in_specs = [feat_spec, w_spec]
    if not tied:
        in_specs.append(w_spec)
    if has_noise:
        in_specs.append(nproj_spec)

    kernel = _make_kernel(tied, has_noise, nonlinearity)

    # TODO(synk): on v7x, verify 'parallel' shards the instance axis across both
    # TensorCores; otherwise switch to pltpu.CORE_PARALLEL / an explicit core axis.
    return pl.pallas_call(
        kernel,
        out_shape=jax.ShapeDtypeStruct((I, B, F), jnp.float32),
        grid_spec=pltpu.PrefetchScalarGridSpec(
            num_scalar_prefetch=0,
            grid=grid,
            in_specs=in_specs,
            out_specs=out_spec,
        ),
        compiler_params=pltpu.CompilerParams(
            dimension_semantics=("parallel",),
            vmem_limit_bytes=int(vmem_limit)),
    )(*args)


# ------------------------- Parameter / noise setup -------------------------- #

def init_weights(key, config: Config):
    shape = (config.n_instances, config.n_features, config.n_hidden)
    if config.weight_distri == "normal":
        std = 1.0 / np.sqrt(config.n_hidden)
    else:  # xavier_normal_: gain * sqrt(2 / (fan_in + fan_out))
        std = np.sqrt(2.0 / (config.n_features + config.n_hidden))

    if config.tied_weights:
        w = jax.random.normal(key, shape, dtype=jnp.float32) * std
        return w, None
    k1, k2 = jax.random.split(key)
    w_enc = jax.random.normal(k1, shape, dtype=jnp.float32) * std
    w_dec = jax.random.normal(k2, shape, dtype=jnp.float32) * std
    return w_enc, w_dec


def make_noise(key, config: Config):
    # TODO(synk): noise is sampled with jax.random outside the kernel; an
    # in-kernel pltpu.prng_* variant is possible but not needed for a forward.
    H = config.n_hidden
    if config.noise == NoiseOptions.BERNOULLI:
        bits = jax.random.randint(key, (H,), 0, 2).astype(jnp.float32)
        return bits * 2.0 * config.noise_stdev - config.noise_stdev
    elif config.noise == NoiseOptions.GAUSSIAN:
        return jax.random.normal(key, (H,), dtype=jnp.float32) * config.noise_stdev
    else:
        return None   # no noise -> operand dropped entirely


# ------------------------------ Reference ----------------------------------- #

def reference_forward(features, w_enc, w_dec, noise, nonlinearity):
    """Mirrors the PyTorch module: hidden = x @ W_enc + noise; out = hidden @ W_dec^T."""
    w_dec = w_enc if w_dec is None else w_dec
    hidden = jnp.einsum("ibf,ifh->ibh", features, w_enc)
    if noise is not None:
        hidden = hidden + noise
    out = jnp.einsum("ibh,ifh->ibf", hidden, w_dec)
    if nonlinearity:
        out = jax.nn.relu(out)
    return out


# --------------------------------- Main -------------------------------------- #

if __name__ == "__main__":
    batch = 8
    key = jax.random.PRNGKey(0)
    k_w, k_x, k_n = jax.random.split(key, 3)

    # --- tied weights, no noise, f32 compute (single weight DMA per step) ---
    cfg_tied = Config(n_instances=4, n_features=16, n_hidden=32,
                      tied_weights=True, weight_distri="normal",
                      nonlinearity=True, noise=NoiseOptions.NONE,
                      noise_stdev=0.1)
    w, _ = init_weights(k_w, cfg_tied)
    features = jax.random.normal(
        k_x, (cfg_tied.n_instances, batch, cfg_tied.n_features), dtype=jnp.float32)
    noise_none = make_noise(k_n, cfg_tied)          # None

    out_tied = autoencoder_forward(features, w, None, noise_none,
                                   nonlinearity=cfg_tied.nonlinearity)
    out_tied = jax.block_until_ready(out_tied)
    ref_tied = reference_forward(features, w, None, noise_none, cfg_tied.nonlinearity)
    np.testing.assert_allclose(np.asarray(out_tied), np.asarray(ref_tied),
                               rtol=1e-5, atol=1e-5)

    # --- untied, Gaussian noise, f32 compute, forced multi-step grid ---
    cfg_untied = Config(n_instances=4, n_features=16, n_hidden=32,
                        tied_weights=False, weight_distri="xavier",
                        nonlinearity=True, noise=NoiseOptions.GAUSSIAN,
                        noise_stdev=0.1)
    w_enc, w_dec = init_weights(k_w, cfg_untied)
    noise_g = make_noise(k_n, cfg_untied)

    out_untied = autoencoder_forward(features, w_enc, w_dec, noise_g,
                                     nonlinearity=cfg_untied.nonlinearity,
                                     instances_per_block=2)   # exercise 2 grid steps
    out_untied = jax.block_until_ready(out_untied)
    ref_untied = reference_forward(features, w_enc, w_dec, noise_g,
                                   cfg_untied.nonlinearity)
    # Noise is hoisted through the decoder (fp reassociation) -> slightly looser.
    np.testing.assert_allclose(np.asarray(out_untied), np.asarray(ref_untied),
                               rtol=1e-4, atol=1e-4)

    # --- bf16 weights/operands (halved weight DMA, f32 MXU accumulation) ---
    out_bf16 = autoencoder_forward(features, w_enc, w_dec, noise_g,
                                   nonlinearity=cfg_untied.nonlinearity,
                                   compute_dtype=jnp.bfloat16)
    out_bf16 = jax.block_until_ready(out_bf16)
    np.testing.assert_allclose(np.asarray(out_bf16), np.asarray(ref_untied),
                               rtol=3e-2, atol=3e-2)

    print("KERNEL_OK")
</pallas_src>

<mosaic_0001>
module attributes {stable_mosaic.version = 11 : i64} {
  func.func @kernel(%arg0: i32, %arg1: memref<4x8x16xf32, #tpu.memory_space<vmem>>, %arg2: memref<4x16x32xf32, #tpu.memory_space<vmem>>, %arg3: memref<4x8x16xf32, #tpu.memory_space<vmem>>) attributes {dimension_semantics = [#tpu.dimension_semantics<parallel>], iteration_bounds = array<i64: 1>, scalar_prefetch = 0 : i64, scratch_operands = 0 : i64, tpu.core_type = #tpu.core_type<tc>, window_params = [{transform_indices = @transform_0, window_bounds = array<i64: 4, 8, 16>}, {transform_indices = @transform_1, window_bounds = array<i64: 4, 16, 32>}, {transform_indices = @transform_2, window_bounds = array<i64: 4, 8, 16>}]} {
    %c0 = arith.constant 0 : index
    %c0_0 = arith.constant 0 : index
    %c0_1 = arith.constant 0 : index
    %0 = vector.load %arg2[%c0, %c0_0, %c0_1] : memref<4x16x32xf32, #tpu.memory_space<vmem>>, vector<4x16x32xf32>
    %c0_2 = arith.constant 0 : index
    %c0_3 = arith.constant 0 : index
    %c0_4 = arith.constant 0 : index
    %1 = vector.load %arg1[%c0_2, %c0_3, %c0_4] : memref<4x8x16xf32, #tpu.memory_space<vmem>>, vector<4x8x16xf32>
    "tpu.trace_start"() <{level = 10 : i32, message = "gbf,gfh->gbh"}> : () -> ()
    %cst = arith.constant dense<0.000000e+00> : vector<4x8x32xf32>
    %2 = tpu.matmul %1, %0, %cst {dimension_numbers = #tpu.dot_dimension_numbers<[2], [1], [1], [2], [0, 0, 0, 1, 1, 2], [0], [0]>} : vector<4x8x16xf32>, vector<4x16x32xf32>, vector<4x8x32xf32> -> vector<4x8x32xf32>
    "tpu.trace_stop"() : () -> ()
    "tpu.trace_start"() <{level = 10 : i32, message = "gbh,gfh->gbf"}> : () -> ()
    %cst_5 = arith.constant dense<0.000000e+00> : vector<4x8x16xf32>
    %3 = tpu.matmul %2, %0, %cst_5 {dimension_numbers = #tpu.dot_dimension_numbers<[2], [2], [1], [1], [0, 0, 0, 1, 1, 1], [0], [0]>} : vector<4x8x32xf32>, vector<4x16x32xf32>, vector<4x8x16xf32> -> vector<4x8x16xf32>
    "tpu.trace_stop"() : () -> ()
    %cst_6 = arith.constant 0.000000e+00 : f32
    %4 = vector.broadcast %cst_6 : f32 to vector<4x8x16xf32>
    %5 = arith.maximumf %3, %4 : vector<4x8x16xf32>
    %c0_7 = arith.constant 0 : index
    %c0_8 = arith.constant 0 : index
    %c0_9 = arith.constant 0 : index
    %6 = vector.load %arg3[%c0_7, %c0_8, %c0_9] : memref<4x8x16xf32, #tpu.memory_space<vmem>>, vector<4x8x16xf32>
    tpu.vector_store %arg3[%c0_7, %c0_8, %c0_9], %5 {strides = array<i32>} : memref<4x8x16xf32, #tpu.memory_space<vmem>>, vector<4x8x16xf32>,
    return
  }
  func.func @transform_0(%arg0: i32) -> (i32, i32, i32) {
    %c0_i32 = arith.constant 0 : i32
    %c0_i32_0 = arith.constant 0 : i32
    %c0_i32_1 = arith.constant 0 : i32
    return %arg0, %c0_i32, %c0_i32_0 : i32, i32, i32
  }
  func.func @transform_1(%arg0: i32) -> (i32, i32, i32) {
    %c0_i32 = arith.constant 0 : i32
    %c0_i32_0 = arith.constant 0 : i32
    %c0_i32_1 = arith.constant 0 : i32
    return %arg0, %c0_i32, %c0_i32_0 : i32, i32, i32
  }
  func.func @transform_2(%arg0: i32) -> (i32, i32, i32) {
    %c0_i32 = arith.constant 0 : i32
    %c0_i32_0 = arith.constant 0 : i32
    %c0_i32_1 = arith.constant 0 : i32
    return %arg0, %c0_i32, %c0_i32_0 : i32, i32, i32
  }
}

</mosaic_0001>

<llo_original>
// kernel: tpu_custom_call.1
$region0: #{tpu_custom_call.1}
  #allocation0 [shape = 'u32[]', space=smem, size = 0x4, offset = 0x4, fixed_abs, tag = 'smem constant byte address 0x4 - core index']
  #allocation1 [shape = 'u32[144,128]{1,0:T(1,128)}', space=vmem, size = 0x12000, scoped, tag = 'internal scratch']
  %s0 = inlined_call_operand.hbm [shape: f32[4,8,16], index: 0, kind: input, shape index: {}]
  %s1 = inlined_call_operand.hbm [shape: f32[4,16,32], index: 1, kind: input, shape index: {}]
  %s2 = inlined_call_operand.hbm [shape: f32[4,8,16], index: 2, kind: output, shape index: {}]
  %s3 = sld [smem:[#allocation0]]
  $region26: #{tpu_custom_call.1} parent=0
    _
  %s5 = ssub.s32 1, %s3
  %s6 = scalar_select 0, %s5, %s3
  $region1: #{tpu_custom_call.1} parent=0
    #allocation2 [shape = 'u8[16384]{0}', space=vmem, size = 0x4000, scoped, tag = 'input window, operand 0, single buffered']
    #allocation3 [shape = 's32[1]{0}', space=sflag, size = 0x4, scoped, tag = 'scoped memory for tpu_custom_call.1']
    #allocation4 [shape = 's32[1]{0}', space=sflag, size = 0x4, scoped, tag = 'scoped memory for tpu_custom_call.1']
    #allocation5 [shape = 'u8[32768]{0}', space=vmem, size = 0x8000, scoped, tag = 'input window, operand 1, single buffered']
    #allocation6 [shape = 's32[1]{0}', space=sflag, size = 0x4, scoped, tag = 'scoped memory for tpu_custom_call.1']
    #allocation7 [shape = 'u8[16384]{0}', space=vmem, size = 0x4000, scoped, tag = 'output window, operand 0, single buffered']
    %7 = vsyncpa [#allocation3], 0
    %8 = vsyncpa [#allocation6], 0
    %9 = vsyncpa [#allocation4], 0
    // Predicated region
    $region2: #{tpu_custom_call.1} parent=1 // pred_check
      _
    $region3: #{tpu_custom_call.1} parent=1 // pred_check_branch
      %11 = sbr.rel (0) target = $region5
    $region4: #{tpu_custom_call.1} parent=1 // pred_region
      %s13 = ssub.s32 512, 512
      %14 = vsyncadd [#allocation3], %s13
      %s15 = sshll.u32 [#allocation2], 4
      %s16 = int_to_ptr.vmem [resolvable:$true] %s15
      %21 = dma.hbm_to_vmem [thread:$0]  %s0, 512, %s16, [#allocation3], 128, 128, 8
    $region5: #{tpu_custom_call.1} parent=1 // pred_fallthru
      _
    // Predicated region
    $region6: #{tpu_custom_call.1} parent=1 // pred_check
      _
    $region7: #{tpu_custom_call.1} parent=1 // pred_check_branch
      %23 = sbr.rel (0) target = $region9
    $region8: #{tpu_custom_call.1} parent=1 // pred_region
      %s25 = ssub.s32 1024, 1024
      %26 = vsyncadd [#allocation6], %s25
      %s27 = sshll.u32 [#allocation5], 4
      %s28 = int_to_ptr.vmem [resolvable:$true] %s27
      %33 = dma.hbm_to_vmem [thread:$0]  %s1, 1024, %s28, [#allocation6], 128, 128, 8
    $region9: #{tpu_custom_call.1} parent=1 // pred_fallthru
      _
    // Predicated region
    $region10: #{tpu_custom_call.1} parent=1 // pred_check
      _
    $region11: #{tpu_custom_call.1} parent=1 // pred_check_branch
      %35 = sbr.rel (0) target = $region13
    $region12: #{tpu_custom_call.1} parent=1 // pred_region
      %36 = dma.done [#allocation3], 512
    $region13: #{tpu_custom_call.1} parent=1 // pred_fallthru
      _
    // Predicated region
    $region14: #{tpu_custom_call.1} parent=1 // pred_check
      _
    $region15: #{tpu_custom_call.1} parent=1 // pred_check_branch
      %38 = sbr.rel (0) target = $region17
    $region16: #{tpu_custom_call.1} parent=1 // pred_region
      %39 = dma.done [#allocation6], 1024
    $region17: #{tpu_custom_call.1} parent=1 // pred_fallthru
      _
    %v40 = vld [vmem:[#allocation5] sm:$0xff]
    %v41 = vld [vmem:[#allocation5 + $0x8] sm:$0xff]
    %v42 = vld [vmem:[#allocation5 + $0x10] sm:$0xff]
    %v43 = vld [vmem:[#allocation5 + $0x18] sm:$0xff]
    %v44 = vld [vmem:[#allocation5 + $0x20] sm:$0xff]
    %v45 = vld [vmem:[#allocation5 + $0x28] sm:$0xff]
    %v46 = vld [vmem:[#allocation5 + $0x30] sm:$0xff]
    %v47 = vld [vmem:[#allocation5 + $0x38] sm:$0xff]
    %v48 = vld [vmem:[#allocation2] sm:$0xff]
    %v49 = vld [vmem:[#allocation2 + $0x8] sm:$0xff]
    %v50 = vld [vmem:[#allocation2 + $0x10] sm:$0xff]
    %v51 = vld [vmem:[#allocation2 + $0x18] sm:$0xff]
    %vm52 = vcmask 130048
    %v54 = vsel %vm52, %v48, 0
    %56 = vmatprep.subr.mxu0 0.0
    %57 = vmatpush1.msra.mxu0 %v40
    %58 = vmatprep.subr.mxu0 0.0
    %59 = vmatpush1.msra.mxu0 %v41
    %60 = vmatprep.subr.mxu0 0.0
    %61 = vmatpush1.msra.mxu0 0.0
    %62 = vmatprep.subr.mxu0 0.0
    %63 = vmatpush1.msra.mxu0 0.0
    %64 = vmatprep.subr.mxu0 0.0
    %65 = vmatpush1.msra.mxu0 0.0
    %66 = vmatprep.subr.mxu0 0.0
    %67 = vmatpush1.msra.mxu0 0.0
    %68 = vmatprep.subr.mxu0 0.0
    %69 = vmatpush1.msra.mxu0 0.0
    %70 = vmatprep.subr.mxu0 0.0
    %71 = vmatpush1.msra.mxu0 0.0
    %72 = vmatprep.subr.mxu0 0.0
    %73 = vmatpush1.msra.mxu0 0.0
    %74 = vmatprep.subr.mxu0 0.0
    %75 = vmatpush1.msra.mxu0 0.0
    %76 = vmatprep.subr.mxu0 0.0
    %77 = vmatpush1.msra.mxu0 0.0
    %78 = vmatprep.subr.mxu0 0.0
    %79 = vmatpush1.msra.mxu0 0.0
    %80 = vmatprep.subr.mxu0 0.0
    %81 = vmatpush1.msra.mxu0 0.0
    %82 = vmatprep.subr.mxu0 0.0
    %83 = vmatpush1.msra.mxu0 0.0
    %84 = vmatprep.subr.mxu0 0.0
    %85 = vmatpush1.msra.mxu0 0.0
    %86 = vmatprep.subr.mxu0 0.0
    %87 = vmatpush1.msra.mxu0 0.0
    %88 = vmatprep.subr.mxu0 0.0
    %89 = vmatpush1.msra.mxu0 0.0
    %90 = vmatprep.subr.mxu0 0.0
    %91 = vmatpush1.msra.mxu0 0.0
    %92 = vmatprep.subr.mxu0 0.0
    %93 = vmatpush1.msra.mxu0 0.0
    %94 = vmatprep.subr.mxu0 0.0
    %95 = vmatpush1.msra.mxu0 0.0
    %96 = vmatprep.subr.mxu0 0.0
    %97 = vmatpush1.msra.mxu0 0.0
    %98 = vmatprep.subr.mxu0 0.0
    %99 = vmatpush1.msra.mxu0 0.0
    %100 = vmatprep.subr.mxu0 0.0
    %101 = vmatpush1.msra.mxu0 0.0
    %102 = vmatprep.subr.mxu0 0.0
    %103 = vmatpush1.msra.mxu0 0.0
    %104 = vmatprep.subr.mxu0 0.0
    %105 = vmatpush1.msra.mxu0 0.0
    %106 = vmatprep.subr.mxu0 0.0
    %107 = vmatpush1.msra.mxu0 0.0
    %108 = vmatprep.subr.mxu0 0.0
    %109 = vmatpush1.msra.mxu0 0.0
    %110 = vmatprep.subr.mxu0 0.0
    %111 = vmatpush1.msra.mxu0 0.0
    %112 = vmatprep.subr.mxu0 0.0
    %113 = vmatpush1.msra.mxu0 0.0
    %114 = vmatprep.subr.mxu0 0.0
    %115 = vmatpush1.msra.mxu0 0.0
    %116 = vmatprep.subr.mxu0 0.0
    %117 = vmatpush1.msra.mxu0 0.0
    %118 = vmatprep.subr.mxu0 0.0
    %119 = vmatpush1.msra.mxu0 0.0
    %120 = vmatprep.mubr.f32.mxu0 0.0
    %121 = vmatmul.mubr.f32.gmra.mrb[0].mxu0 %v54
    %v122 = vpop.f32.mrb[0].mxu0
    %v123 = vadd.f32 0.0, %v122
    %v124 = vpop.f32.mrb[0].mxu0
    %125 = vdwg.mxu0
    %v127 = vsel %vm52, %v49, 0
    %129 = vmatprep.subr.mxu0 0.0
    %130 = vmatpush1.msra.mxu0 %v42
    %131 = vmatprep.subr.mxu0 0.0
    %132 = vmatpush1.msra.mxu0 %v43
    %133 = vmatprep.subr.mxu0 0.0
    %134 = vmatpush1.msra.mxu0 0.0
    %135 = vmatprep.subr.mxu0 0.0
    %136 = vmatpush1.msra.mxu0 0.0
    %137 = vmatprep.subr.mxu0 0.0
    %138 = vmatpush1.msra.mxu0 0.0
    %139 = vmatprep.subr.mxu0 0.0
    %140 = vmatpush1.msra.mxu0 0.0
    %141 = vmatprep.subr.mxu0 0.0
    %142 = vmatpush1.msra.mxu0 0.0
    %143 = vmatprep.subr.mxu0 0.0
    %144 = vmatpush1.msra.mxu0 0.0
    %145 = vmatprep.subr.mxu0 0.0
    %146 = vmatpush1.msra.mxu0 0.0
    %147 = vmatprep.subr.mxu0 0.0
    %148 = vmatpush1.msra.mxu0 0.0
    %149 = vmatprep.subr.mxu0 0.0
    %150 = vmatpush1.msra.mxu0 0.0
    %151 = vmatprep.subr.mxu0 0.0
    %152 = vmatpush1.msra.mxu0 0.0
    %153 = vmatprep.subr.mxu0 0.0
    %154 = vmatpush1.msra.mxu0 0.0
    %155 = vmatprep.subr.mxu0 0.0
    %156 = vmatpush1.msra.mxu0 0.0
    %157 = vmatprep.subr.mxu0 0.0
    %158 = vmatpush1.msra.mxu0 0.0
    %159 = vmatprep.subr.mxu0 0.0
    %160 = vmatpush1.msra.mxu0 0.0
    %161 = vmatprep.subr.mxu0 0.0
    %162 = vmatpush1.msra.mxu0 0.0
    %163 = vmatprep.subr.mxu0 0.0
    %164 = vmatpush1.msra.mxu0 0.0
    %165 = vmatprep.subr.mxu0 0.0
    %166 = vmatpush1.msra.mxu0 0.0
    %167 = vmatprep.subr.mxu0 0.0
    %168 = vmatpush1.msra.mxu0 0.0
    %169 = vmatprep.subr.mxu0 0.0
    %170 = vmatpush1.msra.mxu0 0.0
    %171 = vmatprep.subr.mxu0 0.0
    %172 = vmatpush1.msra.mxu0 0.0
    %173 = vmatprep.subr.mxu0 0.0
    %174 = vmatpush1.msra.mxu0 0.0
    %175 = vmatprep.subr.mxu0 0.0
    %176 = vmatpush1.msra.mxu0 0.0
    %177 = vmatprep.subr.mxu0 0.0
    %178 = vmatpush1.msra.mxu0 0.0
    %179 = vmatprep.subr.mxu0 0.0
    %180 = vmatpush1.msra.mxu0 0.0
    %181 = vmatprep.subr.mxu0 0.0
    %182 = vmatpush1.msra.mxu0 0.0
    %183 = vmatprep.subr.mxu0 0.0
    %184 = vmatpush1.msra.mxu0 0.0
    %185 = vmatprep.subr.mxu0 0.0
    %186 = vmatpush1.msra.mxu0 0.0
    %187 = vmatprep.subr.mxu0 0.0
    %188 = vmatpush1.msra.mxu0 0.0
    %189 = vmatprep.subr.mxu0 0.0
    %190 = vmatpush1.msra.mxu0 0.0
    %191 = vmatprep.subr.mxu0 0.0
    %192 = vmatpush1.msra.mxu0 0.0
    %193 = vmatprep.mubr.f32.mxu0 0.0
    %194 = vmatmul.mubr.f32.gmra.mrb[0].mxu0 %v127
    %v195 = vpop.f32.mrb[0].mxu0
    %v196 = vadd.f32 0.0, %v195
    %v197 = vpop.f32.mrb[0].mxu0
    %198 = vdwg.mxu0
    %v200 = vsel %vm52, %v50, 0
    %202 = vmatprep.subr.mxu0 0.0
    %203 = vmatpush1.msra.mxu0 %v44
    %204 = vmatprep.subr.mxu0 0.0
    %205 = vmatpush1.msra.mxu0 %v45
    %206 = vmatprep.subr.mxu0 0.0
    %207 = vmatpush1.msra.mxu0 0.0
    %208 = vmatprep.subr.mxu0 0.0
    %209 = vmatpush1.msra.mxu0 0.0
    %210 = vmatprep.subr.mxu0 0.0
    %211 = vmatpush1.msra.mxu0 0.0
    %212 = vmatprep.subr.mxu0 0.0
    %213 = vmatpush1.msra.mxu0 0.0
    %214 = vmatprep.subr.mxu0 0.0
    %215 = vmatpush1.msra.mxu0 0.0
    %216 = vmatprep.subr.mxu0 0.0
    %217 = vmatpush1.msra.mxu0 0.0
    %218 = vmatprep.subr.mxu0 0.0
    %219 = vmatpush1.msra.mxu0 0.0
    %220 = vmatprep.subr.mxu0 0.0
    %221 = vmatpush1.msra.mxu0 0.0
    %222 = vmatprep.subr.mxu0 0.0
    %223 = vmatpush1.msra.mxu0 0.0
    %224 = vmatprep.subr.mxu0 0.0
    %225 = vmatpush1.msra.mxu0 0.0
    %226 = vmatprep.subr.mxu0 0.0
    %227 = vmatpush1.msra.mxu0 0.0
    %228 = vmatprep.subr.mxu0 0.0
    %229 = vmatpush1.msra.mxu0 0.0
    %230 = vmatprep.subr.mxu0 0.0
    %231 = vmatpush1.msra.mxu0 0.0
    %232 = vmatprep.subr.mxu0 0.0
    %233 = vmatpush1.msra.mxu0 0.0
    %234 = vmatprep.subr.mxu0 0.0
    %235 = vmatpush1.msra.mxu0 0.0
    %236 = vmatprep.subr.mxu0 0.0
    %237 = vmatpush1.msra.mxu0 0.0
    %238 = vmatprep.subr.mxu0 0.0
    %239 = vmatpush1.msra.mxu0 0.0
    %240 = vmatprep.subr.mxu0 0.0
    %241 = vmatpush1.msra.mxu0 0.0
    %242 = vmatprep.subr.mxu0 0.0
    %243 = vmatpush1.msra.mxu0 0.0
    %244 = vmatprep.subr.mxu0 0.0
    %245 = vmatpush1.msra.mxu0 0.0
    %246 = vmatprep.subr.mxu0 0.0
    %247 = vmatpush1.msra.mxu0 0.0
    %248 = vmatprep.subr.mxu0 0.0
    %249 = vmatpush1.msra.mxu0 0.0
    %250 = vmatprep.subr.mxu0 0.0
    %251 = vmatpush1.msra.mxu0 0.0
    %252 = vmatprep.subr.mxu0 0.0
    %253 = vmatpush1.msra.mxu0 0.0
    %254 = vmatprep.subr.mxu0 0.0
    %255 = vmatpush1.msra.mxu0 0.0
    %256 = vmatprep.subr.mxu0 0.0
    %257 = vmatpush1.msra.mxu0 0.0
    %258 = vmatprep.subr.mxu0 0.0
    %259 = vmatpush1.msra.mxu0 0.0
    %260 = vmatprep.subr.mxu0 0.0
    %261 = vmatpush1.msra.mxu0 0.0
    %262 = vmatprep.subr.mxu0 0.0
    %263 = vmatpush1.msra.mxu0 0.0
    %264 = vmatprep.subr.mxu0 0.0
    %265 = vmatpush1.msra.mxu0 0.0
    %266 = vmatprep.mubr.f32.mxu0 0.0
    %267 = vmatmul.mubr.f32.gmra.mrb[0].mxu0 %v200
    %v268 = vpop.f32.mrb[0].mxu0
    %v269 = vadd.f32 0.0, %v268
    %v270 = vpop.f32.mrb[0].mxu0
    %271 = vdwg.mxu0
    %v273 = vsel %vm52, %v51, 0
    %275 = vmatprep.subr.mxu0 0.0
    %276 = vmatpush1.msra.mxu0 %v46
    %277 = vmatprep.subr.mxu0 0.0
    %278 = vmatpush1.msra.mxu0 %v47
    %279 = vmatprep.subr.mxu0 0.0
    %280 = vmatpush1.msra.mxu0 0.0
    %281 = vmatprep.subr.mxu0 0.0
    %282 = vmatpush1.msra.mxu0 0.0
    %283 = vmatprep.subr.mxu0 0.0
    %284 = vmatpush1.msra.mxu0 0.0
    %285 = vmatprep.subr.mxu0 0.0
    %286 = vmatpush1.msra.mxu0 0.0
    %287 = vmatprep.subr.mxu0 0.0
    %288 = vmatpush1.msra.mxu0 0.0
    %289 = vmatprep.subr.mxu0 0.0
    %290 = vmatpush1.msra.mxu0 0.0
    %291 = vmatprep.subr.mxu0 0.0
    %292 = vmatpush1.msra.mxu0 0.0
    %293 = vmatprep.subr.mxu0 0.0
    %294 = vmatpush1.msra.mxu0 0.0
    %295 = vmatprep.subr.mxu0 0.0
    %296 = vmatpush1.msra.mxu0 0.0
    %297 = vmatprep.subr.mxu0 0.0
    %298 = vmatpush1.msra.mxu0 0.0
    %299 = vmatprep.subr.mxu0 0.0
    %300 = vmatpush1.msra.mxu0 0.0
    %301 = vmatprep.subr.mxu0 0.0
    %302 = vmatpush1.msra.mxu0 0.0
    %303 = vmatprep.subr.mxu0 0.0
    %304 = vmatpush1.msra.mxu0 0.0
    %305 = vmatprep.subr.mxu0 0.0
    %306 = vmatpush1.msra.mxu0 0.0
    %307 = vmatprep.subr.mxu0 0.0
    %308 = vmatpush1.msra.mxu0 0.0
    %309 = vmatprep.subr.mxu0 0.0
    %310 = vmatpush1.msra.mxu0 0.0
    %311 = vmatprep.subr.mxu0 0.0
    %312 = vmatpush1.msra.mxu0 0.0
    %313 = vmatprep.subr.mxu0 0.0
    %314 = vmatpush1.msra.mxu0 0.0
    %315 = vmatprep.subr.mxu0 0.0
    %316 = vmatpush1.msra.mxu0 0.0
    %317 = vmatprep.subr.mxu0 0.0
    %318 = vmatpush1.msra.mxu0 0.0
    %319 = vmatprep.subr.mxu0 0.0
    %320 = vmatpush1.msra.mxu0 0.0
    %321 = vmatprep.subr.mxu0 0.0
    %322 = vmatpush1.msra.mxu0 0.0
    %323 = vmatprep.subr.mxu0 0.0
    %324 = vmatpush1.msra.mxu0 0.0
    %325 = vmatprep.subr.mxu0 0.0
    %326 = vmatpush1.msra.mxu0 0.0
    %327 = vmatprep.subr.mxu0 0.0
    %328 = vmatpush1.msra.mxu0 0.0
    %329 = vmatprep.subr.mxu0 0.0
    %330 = vmatpush1.msra.mxu0 0.0
    %331 = vmatprep.subr.mxu0 0.0
    %332 = vmatpush1.msra.mxu0 0.0
    %333 = vmatprep.subr.mxu0 0.0
    %334 = vmatpush1.msra.mxu0 0.0
    %335 = vmatprep.subr.mxu0 0.0
    %336 = vmatpush1.msra.mxu0 0.0
    %337 = vmatprep.subr.mxu0 0.0
    %338 = vmatpush1.msra.mxu0 0.0
    %339 = vmatprep.mubr.f32.mxu0 0.0
    %340 = vmatmul.mubr.f32.gmra.mrb[0].mxu0 %v273
    %v341 = vpop.f32.mrb[0].mxu0
    %v342 = vadd.f32 0.0, %v341
    %v343 = vpop.f32.mrb[0].mxu0
    %344 = vdwg.mxu0
    %vm345 = vcmask 261120
    %v347 = vsel %vm345, %v123, 0
    %v350 = vsel %vm345, %v40, 0
    %v353 = vsel %vm345, %v41, 0
    %355 = vmatprep.subr.mxu0 0.0
    %356 = vmatpush1.xpose.msra.mxu0 %v350
    %357 = vmatprep.subr.mxu0 0.0
    %358 = vmatpush1.xpose.msra.mxu0 %v353
    %359 = vmatprep.subr.mxu0 0.0
    %360 = vmatpush1.xpose.msra.mxu0 0.0
    %361 = vmatprep.subr.mxu0 0.0
    %362 = vmatpush1.xpose.msra.mxu0 0.0
    %363 = vmatprep.subr.mxu0 0.0
    %364 = vmatpush1.xpose.msra.mxu0 0.0
    %365 = vmatprep.subr.mxu0 0.0
    %366 = vmatpush1.xpose.msra.mxu0 0.0
    %367 = vmatprep.subr.mxu0 0.0
    %368 = vmatpush1.xpose.msra.mxu0 0.0
    %369 = vmatprep.subr.mxu0 0.0
    %370 = vmatpush1.xpose.msra.mxu0 0.0
    %371 = vmatprep.subr.mxu0 0.0
    %372 = vmatpush1.xpose.msra.mxu0 0.0
    %373 = vmatprep.subr.mxu0 0.0
    %374 = vmatpush1.xpose.msra.mxu0 0.0
    %375 = vmatprep.subr.mxu0 0.0
    %376 = vmatpush1.xpose.msra.mxu0 0.0
    %377 = vmatprep.subr.mxu0 0.0
    %378 = vmatpush1.xpose.msra.mxu0 0.0
    %379 = vmatprep.subr.mxu0 0.0
    %380 = vmatpush1.xpose.msra.mxu0 0.0
    %381 = vmatprep.subr.mxu0 0.0
    %382 = vmatpush1.xpose.msra.mxu0 0.0
    %383 = vmatprep.subr.mxu0 0.0
    %384 = vmatpush1.xpose.msra.mxu0 0.0
    %385 = vmatprep.subr.mxu0 0.0
    %386 = vmatpush1.xpose.msra.mxu0 0.0
    %387 = vmatprep.subr.mxu0 0.0
    %388 = vmatpush1.xpose.msra.mxu0 0.0
    %389 = vmatprep.subr.mxu0 0.0
    %390 = vmatpush1.xpose.msra.mxu0 0.0
    %391 = vmatprep.subr.mxu0 0.0
    %392 = vmatpush1.xpose.msra.mxu0 0.0
    %393 = vmatprep.subr.mxu0 0.0
    %394 = vmatpush1.xpose.msra.mxu0 0.0
    %395 = vmatprep.subr.mxu0 0.0
    %396 = vmatpush1.xpose.msra.mxu0 0.0
    %397 = vmatprep.subr.mxu0 0.0
    %398 = vmatpush1.xpose.msra.mxu0 0.0
    %399 = vmatprep.subr.mxu0 0.0
    %400 = vmatpush1.xpose.msra.mxu0 0.0
    %401 = vmatprep.subr.mxu0 0.0
    %402 = vmatpush1.xpose.msra.mxu0 0.0
    %403 = vmatprep.subr.mxu0 0.0
    %404 = vmatpush1.xpose.msra.mxu0 0.0
    %405 = vmatprep.subr.mxu0 0.0
    %406 = vmatpush1.xpose.msra.mxu0 0.0
    %407 = vmatprep.subr.mxu0 0.0
    %408 = vmatpush1.xpose.msra.mxu0 0.0
    %409 = vmatprep.subr.mxu0 0.0
    %410 = vmatpush1.xpose.msra.mxu0 0.0
    %411 = vmatprep.subr.mxu0 0.0
    %412 = vmatpush1.xpose.msra.mxu0 0.0
    %413 = vmatprep.subr.mxu0 0.0
    %414 = vmatpush1.xpose.msra.mxu0 0.0
    %415 = vmatprep.subr.mxu0 0.0
    %416 = vmatpush1.xpose.msra.mxu0 0.0
    %417 = vmatprep.subr.mxu0 0.0
    %418 = vmatpush1.xpose.msra.mxu0 0.0
    %419 = vmatprep.mubr.f32.mxu0 0.0
    %420 = vmatmul.mubr.f32.gmra.mrb[0].mxu0 %v347
    %v421 = vpop.f32.mrb[0].mxu0
    %v422 = vadd.f32 0.0, %v421
    %v423 = vpop.f32.mrb[0].mxu0
    %424 = vdwg.mxu0
    %v426 = vsel %vm345, %v196, 0
    %v429 = vsel %vm345, %v42, 0
    %v432 = vsel %vm345, %v43, 0
    %434 = vmatprep.subr.mxu0 0.0
    %435 = vmatpush1.xpose.msra.mxu0 %v429
    %436 = vmatprep.subr.mxu0 0.0
    %437 = vmatpush1.xpose.msra.mxu0 %v432
    %438 = vmatprep.subr.mxu0 0.0
    %439 = vmatpush1.xpose.msra.mxu0 0.0
    %440 = vmatprep.subr.mxu0 0.0
    %441 = vmatpush1.xpose.msra.mxu0 0.0
    %442 = vmatprep.subr.mxu0 0.0
    %443 = vmatpush1.xpose.msra.mxu0 0.0
    %444 = vmatprep.subr.mxu0 0.0
    %445 = vmatpush1.xpose.msra.mxu0 0.0
    %446 = vmatprep.subr.mxu0 0.0
    %447 = vmatpush1.xpose.msra.mxu0 0.0
    %448 = vmatprep.subr.mxu0 0.0
    %449 = vmatpush1.xpose.msra.mxu0 0.0
    %450 = vmatprep.subr.mxu0 0.0
    %451 = vmatpush1.xpose.msra.mxu0 0.0
    %452 = vmatprep.subr.mxu0 0.0
    %453 = vmatpush1.xpose.msra.mxu0 0.0
    %454 = vmatprep.subr.mxu0 0.0
    %455 = vmatpush1.xpose.msra.mxu0 0.0
    %456 = vmatprep.subr.mxu0 0.0
    %457 = vmatpush1.xpose.msra.mxu0 0.0
    %458 = vmatprep.subr.mxu0 0.0
    %459 = vmatpush1.xpose.msra.mxu0 0.0
    %460 = vmatprep.subr.mxu0 0.0
    %461 = vmatpush1.xpose.msra.mxu0 0.0
    %462 = vmatprep.subr.mxu0 0.0
    %463 = vmatpush1.xpose.msra.mxu0 0.0
    %464 = vmatprep.subr.mxu0 0.0
    %465 = vmatpush1.xpose.msra.mxu0 0.0
    %466 = vmatprep.subr.mxu0 0.0
    %467 = vmatpush1.xpose.msra.mxu0 0.0
    %468 = vmatprep.subr.mxu0 0.0
    %469 = vmatpush1.xpose.msra.mxu0 0.0
    %470 = vmatprep.subr.mxu0 0.0
    %471 = vmatpush1.xpose.msra.mxu0 0.0
    %472 = vmatprep.subr.mxu0 0.0
    %473 = vmatpush1.xpose.msra.mxu0 0.0
    %474 = vmatprep.subr.mxu0 0.0
    %475 = vmatpush1.xpose.msra.mxu0 0.0
    %476 = vmatprep.subr.mxu0 0.0
    %477 = vmatpush1.xpose.msra.mxu0 0.0
    %478 = vmatprep.subr.mxu0 0.0
    %479 = vmatpush1.xpose.msra.mxu0 0.0
    %480 = vmatprep.subr.mxu0 0.0
    %481 = vmatpush1.xpose.msra.mxu0 0.0
    %482 = vmatprep.subr.mxu0 0.0
    %483 = vmatpush1.xpose.msra.mxu0 0.0
    %484 = vmatprep.subr.mxu0 0.0
    %485 = vmatpush1.xpose.msra.mxu0 0.0
    %486 = vmatprep.subr.mxu0 0.0
    %487 = vmatpush1.xpose.msra.mxu0 0.0
    %488 = vmatprep.subr.mxu0 0.0
    %489 = vmatpush1.xpose.msra.mxu0 0.0
    %490 = vmatprep.subr.mxu0 0.0
    %491 = vmatpush1.xpose.msra.mxu0 0.0
    %492 = vmatprep.subr.mxu0 0.0
    %493 = vmatpush1.xpose.msra.mxu0 0.0
    %494 = vmatprep.subr.mxu0 0.0
    %495 = vmatpush1.xpose.msra.mxu0 0.0
    %496 = vmatprep.subr.mxu0 0.0
    %497 = vmatpush1.xpose.msra.mxu0 0.0
    %498 = vmatprep.mubr.f32.mxu0 0.0
    %499 = vmatmul.mubr.f32.gmra.mrb[0].mxu0 %v426
    %v500 = vpop.f32.mrb[0].mxu0
    %v501 = vadd.f32 0.0, %v500
    %v502 = vpop.f32.mrb[0].mxu0
    %503 = vdwg.mxu0
    %v505 = vsel %vm345, %v269, 0
    %v508 = vsel %vm345, %v44, 0
    %v511 = vsel %vm345, %v45, 0
    %513 = vmatprep.subr.mxu0 0.0
    %514 = vmatpush1.xpose.msra.mxu0 %v508
    %515 = vmatprep.subr.mxu0 0.0
    %516 = vmatpush1.xpose.msra.mxu0 %v511
    %517 = vmatprep.subr.mxu0 0.0
    %518 = vmatpush1.xpose.msra.mxu0 0.0
    %519 = vmatprep.subr.mxu0 0.0
    %520 = vmatpush1.xpose.msra.mxu0 0.0
    %521 = vmatprep.subr.mxu0 0.0
    %522 = vmatpush1.xpose.msra.mxu0 0.0
    %523 = vmatprep.subr.mxu0 0.0
    %524 = vmatpush1.xpose.msra.mxu0 0.0
    %525 = vmatprep.subr.mxu0 0.0
    %526 = vmatpush1.xpose.msra.mxu0 0.0
    %527 = vmatprep.subr.mxu0 0.0
    %528 = vmatpush1.xpose.msra.mxu0 0.0
    %529 = vmatprep.subr.mxu0 0.0
    %530 = vmatpush1.xpose.msra.mxu0 0.0
    %531 = vmatprep.subr.mxu0 0.0
    %532 = vmatpush1.xpose.msra.mxu0 0.0
    %533 = vmatprep.subr.mxu0 0.0
    %534 = vmatpush1.xpose.msra.mxu0 0.0
    %535 = vmatprep.subr.mxu0 0.0
    %536 = vmatpush1.xpose.msra.mxu0 0.0
    %537 = vmatprep.subr.mxu0 0.0
    %538 = vmatpush1.xpose.msra.mxu0 0.0
    %539 = vmatprep.subr.mxu0 0.0
    %540 = vmatpush1.xpose.msra.mxu0 0.0
    %541 = vmatprep.subr.mxu0 0.0
    %542 = vmatpush1.xpose.msra.mxu0 0.0
    %543 = vmatprep.subr.mxu0 0.0
    %544 = vmatpush1.xpose.msra.mxu0 0.0
    %545 = vmatprep.subr.mxu0 0.0
    %546 = vmatpush1.xpose.msra.mxu0 0.0
    %547 = vmatprep.subr.mxu0 0.0
    %548 = vmatpush1.xpose.msra.mxu0 0.0
    %549 = vmatprep.subr.mxu0 0.0
    %550 = vmatpush1.xpose.msra.mxu0 0.0
    %551 = vmatprep.subr.mxu0 0.0
    %552 = vmatpush1.xpose.msra.mxu0 0.0
    %553 = vmatprep.subr.mxu0 0.0
    %554 = vmatpush1.xpose.msra.mxu0 0.0
    %555 = vmatprep.subr.mxu0 0.0
    %556 = vmatpush1.xpose.msra.mxu0 0.0
    %557 = vmatprep.subr.mxu0 0.0
    %558 = vmatpush1.xpose.msra.mxu0 0.0
    %559 = vmatprep.subr.mxu0 0.0
    %560 = vmatpush1.xpose.msra.mxu0 0.0
    %561 = vmatprep.subr.mxu0 0.0
    %562 = vmatpush1.xpose.msra.mxu0 0.0
    %563 = vmatprep.subr.mxu0 0.0
    %564 = vmatpush1.xpose.msra.mxu0 0.0
    %565 = vmatprep.subr.mxu0 0.0
    %566 = vmatpush1.xpose.msra.mxu0 0.0
    %567 = vmatprep.subr.mxu0 0.0
    %568 = vmatpush1.xpose.msra.mxu0 0.0
    %569 = vmatprep.subr.mxu0 0.0
    %570 = vmatpush1.xpose.msra.mxu0 0.0
    %571 = vmatprep.subr.mxu0 0.0
    %572 = vmatpush1.xpose.msra.mxu0 0.0
    %573 = vmatprep.subr.mxu0 0.0
    %574 = vmatpush1.xpose.msra.mxu0 0.0
    %575 = vmatprep.subr.mxu0 0.0
    %576 = vmatpush1.xpose.msra.mxu0 0.0
    %577 = vmatprep.mubr.f32.mxu0 0.0
    %578 = vmatmul.mubr.f32.gmra.mrb[0].mxu0 %v505
    %v579 = vpop.f32.mrb[0].mxu0
    %v580 = vadd.f32 0.0, %v579
    %v581 = vpop.f32.mrb[0].mxu0
    %582 = vdwg.mxu0
    %v584 = vsel %vm345, %v342, 0
    %v587 = vsel %vm345, %v46, 0
    %v590 = vsel %vm345, %v47, 0
    %592 = vmatprep.subr.mxu0 0.0
    %593 = vmatpush1.xpose.msra.mxu0 %v587
    %594 = vmatprep.subr.mxu0 0.0
    %595 = vmatpush1.xpose.msra.mxu0 %v590
    %596 = vmatprep.subr.mxu0 0.0
    %597 = vmatpush1.xpose.msra.mxu0 0.0
    %598 = vmatprep.subr.mxu0 0.0
    %599 = vmatpush1.xpose.msra.mxu0 0.0
    %600 = vmatprep.subr.mxu0 0.0
    %601 = vmatpush1.xpose.msra.mxu0 0.0
    %602 = vmatprep.subr.mxu0 0.0
    %603 = vmatpush1.xpose.msra.mxu0 0.0
    %604 = vmatprep.subr.mxu0 0.0
    %605 = vmatpush1.xpose.msra.mxu0 0.0
    %606 = vmatprep.subr.mxu0 0.0
    %607 = vmatpush1.xpose.msra.mxu0 0.0
    %608 = vmatprep.subr.mxu0 0.0
    %609 = vmatpush1.xpose.msra.mxu0 0.0
    %610 = vmatprep.subr.mxu0 0.0
    %611 = vmatpush1.xpose.msra.mxu0 0.0
    %612 = vmatprep.subr.mxu0 0.0
    %613 = vmatpush1.xpose.msra.mxu0 0.0
    %614 = vmatprep.subr.mxu0 0.0
    %615 = vmatpush1.xpose.msra.mxu0 0.0
    %616 = vmatprep.subr.mxu0 0.0
    %617 = vmatpush1.xpose.msra.mxu0 0.0
    %618 = vmatprep.subr.mxu0 0.0
    %619 = vmatpush1.xpose.msra.mxu0 0.0
    %620 = vmatprep.subr.mxu0 0.0
    %621 = vmatpush1.xpose.msra.mxu0 0.0
    %622 = vmatprep.subr.mxu0 0.0
    %623 = vmatpush1.xpose.msra.mxu0 0.0
    %624 = vmatprep.subr.mxu0 0.0
    %625 = vmatpush1.xpose.msra.mxu0 0.0
    %626 = vmatprep.subr.mxu0 0.0
    %627 = vmatpush1.xpose.msra.mxu0 0.0
    %628 = vmatprep.subr.mxu0 0.0
    %629 = vmatpush1.xpose.msra.mxu0 0.0
    %630 = vmatprep.subr.mxu0 0.0
    %631 = vmatpush1.xpose.msra.mxu0 0.0
    %632 = vmatprep.subr.mxu0 0.0
    %633 = vmatpush1.xpose.msra.mxu0 0.0
    %634 = vmatprep.subr.mxu0 0.0
    %635 = vmatpush1.xpose.msra.mxu0 0.0
    %636 = vmatprep.subr.mxu0 0.0
    %637 = vmatpush1.xpose.msra.mxu0 0.0
    %638 = vmatprep.subr.mxu0 0.0
    %639 = vmatpush1.xpose.msra.mxu0 0.0
    %640 = vmatprep.subr.mxu0 0.0
    %641 = vmatpush1.xpose.msra.mxu0 0.0
    %642 = vmatprep.subr.mxu0 0.0
    %643 = vmatpush1.xpose.msra.mxu0 0.0
    %644 = vmatprep.subr.mxu0 0.0
    %645 = vmatpush1.xpose.msra.mxu0 0.0
    %646 = vmatprep.subr.mxu0 0.0
    %647 = vmatpush1.xpose.msra.mxu0 0.0
    %648 = vmatprep.subr.mxu0 0.0
    %649 = vmatpush1.xpose.msra.mxu0 0.0
    %650 = vmatprep.subr.mxu0 0.0
    %651 = vmatpush1.xpose.msra.mxu0 0.0
    %652 = vmatprep.subr.mxu0 0.0
    %653 = vmatpush1.xpose.msra.mxu0 0.0
    %654 = vmatprep.subr.mxu0 0.0
    %655 = vmatpush1.xpose.msra.mxu0 0.0
    %656 = vmatprep.mubr.f32.mxu0 0.0
    %657 = vmatmul.mubr.f32.gmra.mrb[0].mxu0 %v584
    %v658 = vpop.f32.mrb[0].mxu0
    %v659 = vadd.f32 0.0, %v658
    %v660 = vpop.f32.mrb[0].mxu0
    %661 = vdwg.mxu0
    %v662 = vmax.f32 %v422, 0.0
    %v663 = vmax.f32 %v501, 0.0
    %v664 = vmax.f32 %v580, 0.0
    %v665 = vmax.f32 %v659, 0.0
    %666 = vst.msk [vmem:[#allocation7] sm:$0xff] %vm52, %v662
    %667 = vst.msk [vmem:[#allocation7 + $0x8] sm:$0xff] %vm52, %v663
    %668 = vst.msk [vmem:[#allocation7 + $0x10] sm:$0xff] %vm52, %v664
    %669 = vst.msk [vmem:[#allocation7 + $0x18] sm:$0xff] %vm52, %v665
    // Predicated region
    $region18: #{tpu_custom_call.1} parent=1 // pred_check
      _
    $region19: #{tpu_custom_call.1} parent=1 // pred_check_branch
      %671 = sbr.rel (0) target = $region21
    $region20: #{tpu_custom_call.1} parent=1 // pred_region
      %s673 = ssub.s32 512, 512
      %674 = vsyncadd [#allocation4], %s673
      %s675 = sshll.u32 [#allocation7], 4
      %s676 = int_to_ptr.vmem [resolvable:$true] %s675
      %681 = dma.vmem_to_hbm [thread:$0]  %s676, 512, %s2, [#allocation4], 128, 128, 8
    $region21: #{tpu_custom_call.1} parent=1 // pred_fallthru
      _
    // Predicated region
    $region22: #{tpu_custom_call.1} parent=1 // pred_check
      _
    $region23: #{tpu_custom_call.1} parent=1 // pred_check_branch
      %683 = sbr.rel (0) target = $region25
    $region24: #{tpu_custom_call.1} parent=1 // pred_region
      %684 = dma.done [#allocation4], 512
    $region25: #{tpu_custom_call.1} parent=1 // pred_fallthru
      _
    %685 = vsyncpa [#allocation3], 1
    %686 = vsyncpa [#allocation6], 1
    %687 = vsyncpa [#allocation4], 1

</llo_original>
